<compile_context>
chip_gen: v6e
topology: v6e:2x2x1
jax: 0.10.0
libtpu: 0.0.40
codegen_flags: <defaults>
</compile_context>

<pallas_src>
import jax
import jax.numpy as jnp
from jax.experimental import pallas as pl
from jax.experimental.pallas import tpu as pltpu


def _round_up(x, m):
    return ((x + m - 1) // m) * m


def char_decoder_kernel(ids_ref, xtab_ref, whh_ref, wout_ref, bout_ref,
                        h0_ref, c0_ref,
                        scores_ref, hout_ref, cout_ref,
                        hs_ref):
    """Single-invocation fused char-decoder forward.

    ids_ref:    (L*Bp, 1)  int32 char ids (batch padded to Bp, multiple of 8)
    xtab_ref:   (Vr, 4H)   bf16  precomputed emb @ W_ih^T + (b_ih + b_hh), rows padded
    whh_ref:    (H, 4H)    bf16  W_hh^T
    wout_ref:   (H, Vp)    bf16  W_out^T, vocab padded to lane-dense Vp
    bout_ref:   (1, Vp)    f32
    h0/c0_ref:  (Bp, H)    f32
    scores_ref: (L*Bp, Vp) f32   lane-dense output slab
    hout/cout:  (Bp, H)    f32
    hs_ref:     (L*Bp, H)  f32   VMEM scratch collecting h_t across steps
    """
    Bp, H = h0_ref.shape
    LBp = ids_ref.shape[0]
    L = LBp // Bp
    Vr = xtab_ref.shape[0]

    # ---- prologue: fused embedding gather + input projection for ALL steps ----
    # gather(emb, ids) @ W_ih^T + b  ==  one_hot(ids) @ (emb @ W_ih^T + b):
    # one lane-dense MXU matmul instead of an XLA gather plus L tiny matmuls.
    ids = ids_ref[...]                                              # (LBp, 1)
    lane_iota = jax.lax.broadcasted_iota(jnp.int32, (LBp, Vr), 1)
    onehot = jnp.where(lane_iota == ids, 1.0, 0.0).astype(jnp.bfloat16)
    xg_all = jnp.dot(onehot, xtab_ref[...],
                     preferred_element_type=jnp.float32)            # (LBp, 4H) f32

    whh = whh_ref[...]                                              # (H, 4H) bf16, resident
    # TODO(synk): if bundle dumps show W_hh re-pushed to the MXU every step, latch it
    # once with pltpu.matmul_push_rhs / matmul_acc_lhs / matmul_pop (verify first).

    # ---- recurrence: only the serially-dependent work stays in the loop ----
    h = h0_ref[...]                                                 # f32 carried state
    c = c0_ref[...]
    for t in range(L):                                              # static -> fully unrolled
        gates = (xg_all[t * Bp:(t + 1) * Bp, :]
                 + jnp.dot(h.astype(jnp.bfloat16), whh,
                           preferred_element_type=jnp.float32))     # (Bp, 4H) f32
        sig = jax.nn.sigmoid(gates)                                 # one full-tile EUP pass
        th = jnp.tanh(gates)                                        # one full-tile EUP pass
        i = sig[:, 0 * H:1 * H]
        f = sig[:, 1 * H:2 * H]
        o = sig[:, 3 * H:4 * H]
        g = th[:, 2 * H:3 * H]
        c = f * c + i * g                                           # f32 elementwise (v5e-safe)
        h = o * jnp.tanh(c)
        hs_ref[t * Bp:(t + 1) * Bp, :] = h                          # aligned whole-vreg store

    # final LSTM state, written exactly once
    hout_ref[...] = h
    cout_ref[...] = c

    # ---- epilogue: hoisted, lane-dense output projection over all steps ----
    scores_ref[...] = (jnp.dot(hs_ref[...].astype(jnp.bfloat16), wout_ref[...],
                               preferred_element_type=jnp.float32)
                       + bout_ref[...])                             # (LBp, Vp)


def prepare_params(params):
    """One-time parameter prep, hoisted out of the per-call forward path.

    params (PyTorch layouts): emb (V,E), w_ih (4H,E), w_hh (4H,H), b_ih/b_hh (4H,),
                              w_out (V,H), b_out (V,)
    """
    H = params["w_hh"].shape[1]
    V = params["w_out"].shape[0]
    Vp = _round_up(V, 128)                       # lane-dense scores / one-hot width
    Vr = Vp

    emb = params["emb"].astype(jnp.float32)
    w_ih = params["w_ih"].astype(jnp.float32)
    b = (params["b_ih"] + params["b_hh"]).astype(jnp.float32)
    xtab = emb @ w_ih.T + b                                          # (V, 4H)
    xtab_p = (jnp.zeros((Vr, 4 * H), jnp.float32).at[:V].set(xtab)
              .astype(jnp.bfloat16))                                 # (Vr, 4H)

    whh_t = jnp.transpose(params["w_hh"]).astype(jnp.bfloat16)       # (H, 4H)
    wout_p = (jnp.zeros((H, Vp), jnp.float32)
              .at[:, :V].set(jnp.transpose(params["w_out"]).astype(jnp.float32))
              .astype(jnp.bfloat16))                                 # (H, Vp)
    bout_p = jnp.zeros((1, Vp), jnp.float32).at[:, :V].set(
        params["b_out"].reshape(1, V).astype(jnp.float32))           # (1, Vp)

    return {"xtab": xtab_p, "whh": whh_t, "wout": wout_p, "bout": bout_p,
            "H": H, "V": V, "Vp": Vp, "Vr": Vr}


def char_decoder_forward(ids, prepped, dec_hidden=None):
    """Equivalent of CharDecoder.forward.

    ids:        (L, B) int32
    prepped:    output of prepare_params()
    dec_hidden: optional (h0, c0), each (1, B, H)
    returns:    scores (L, B, V), (h_n, c_n) each (1, B, H)
    """
    L, B = ids.shape
    H, V, Vp = prepped["H"], prepped["V"], prepped["Vp"]
    Bp = _round_up(B, 8)                          # sublane-aligned batch

    ids_p = jnp.zeros((L, Bp), jnp.int32).at[:, :B].set(ids.astype(jnp.int32))
    ids_col = ids_p.reshape(L * Bp, 1)

    if dec_hidden is None:
        h0 = jnp.zeros((Bp, H), jnp.float32)
        c0 = jnp.zeros((Bp, H), jnp.float32)
    else:
        h0 = jnp.zeros((Bp, H), jnp.float32).at[:B].set(
            dec_hidden[0].reshape(B, H).astype(jnp.float32))
        c0 = jnp.zeros((Bp, H), jnp.float32).at[:B].set(
            dec_hidden[1].reshape(B, H).astype(jnp.float32))

    vmem = pl.BlockSpec(memory_space=pltpu.MemorySpace.VMEM)
    # TODO(synk): at real CharDecoder training shapes (B in the thousands, H=256) add a
    # batch grid with dimension_semantics=("parallel",) and stream the lane-dense scores
    # block out instead of keeping everything resident (v7x VMEM limit hits first).
    scores_p, h_n, c_n = pl.pallas_call(
        char_decoder_kernel,
        out_shape=(
            jax.ShapeDtypeStruct((L * Bp, Vp), jnp.float32),   # lane-dense scores slab
            jax.ShapeDtypeStruct((Bp, H), jnp.float32),        # h_n (padded batch)
            jax.ShapeDtypeStruct((Bp, H), jnp.float32),        # c_n (padded batch)
        ),
        in_specs=[vmem] * 7,
        out_specs=(vmem, vmem, vmem),
        scratch_shapes=[pltpu.VMEM((L * Bp, H), jnp.float32)],
        compiler_params=pltpu.CompilerParams(vmem_limit_bytes=32 * 1024 * 1024),
    )(ids_col, prepped["xtab"], prepped["whh"], prepped["wout"], prepped["bout"],
      h0, c0)

    scores = scores_p.reshape(L, Bp, Vp)[:, :B, :V]
    return scores, (h_n[:B].reshape(1, B, H), c_n[:B].reshape(1, B, H))


def _reference_forward(ids, params, dec_hidden):
    """Pure-JAX f32 reference matching torch.nn.LSTM + Linear + Embedding semantics."""
    emb = params["emb"]
    x = jnp.take(emb, ids, axis=0)                             # (L, B, E)
    H = params["w_hh"].shape[1]
    h = dec_hidden[0][0]
    c = dec_hidden[1][0]
    wih, whh = params["w_ih"], params["w_hh"]
    b = params["b_ih"] + params["b_hh"]

    def step(carry, x_t):
        h, c = carry
        gates = x_t @ wih.T + h @ whh.T + b
        i = jax.nn.sigmoid(gates[:, 0 * H:1 * H])
        f = jax.nn.sigmoid(gates[:, 1 * H:2 * H])
        g = jnp.tanh(gates[:, 2 * H:3 * H])
        o = jax.nn.sigmoid(gates[:, 3 * H:4 * H])
        c = f * c + i * g
        h = o * jnp.tanh(c)
        return (h, c), h

    (h, c), hs = jax.lax.scan(step, (h, c), x)
    scores = hs @ params["w_out"].T + params["b_out"]
    return scores, (h[None], c[None])


if __name__ == "__main__":
    # Small, deterministic configuration (matches the PyTorch module's defaults).
    L, B = 8, 2            # (length, batch)
    E = 50                 # char_embedding_size
    H = 32                 # hidden_size
    V = 30                 # len(target_vocab.char2id)
    PAD_IDX = 0            # target_vocab.char2id['<pad>']

    key = jax.random.PRNGKey(0)
    keys = jax.random.split(key, 9)

    emb = 0.1 * jax.random.normal(keys[0], (V, E), jnp.float32)
    emb = emb.at[PAD_IDX].set(0.0)    # nn.Embedding padding_idx row is zero

    params = {
        "emb": emb,
        "w_ih": 0.1 * jax.random.normal(keys[1], (4 * H, E), jnp.float32),
        "w_hh": 0.1 * jax.random.normal(keys[2], (4 * H, H), jnp.float32),
        "b_ih": 0.1 * jax.random.normal(keys[3], (4 * H,), jnp.float32),
        "b_hh": 0.1 * jax.random.normal(keys[4], (4 * H,), jnp.float32),
        "w_out": 0.1 * jax.random.normal(keys[5], (V, H), jnp.float32),
        "b_out": 0.1 * jax.random.normal(keys[6], (V,), jnp.float32),
    }

    ids = jax.random.randint(keys[7], (L, B), 0, V, dtype=jnp.int32)
    h0 = 0.1 * jax.random.normal(keys[8], (1, B, H), jnp.float32)
    c0 = jnp.zeros((1, B, H), jnp.float32)

    prepped = prepare_params(params)   # one-time parameter prep (hoisted out of forward)

    scores, (h_n, c_n) = char_decoder_forward(ids, prepped, dec_hidden=(h0, c0))
    jax.block_until_ready((scores, h_n, c_n))

    ref_scores, (ref_h, ref_c) = _reference_forward(ids, params, (h0, c0))
    assert scores.shape == (L, B, V)
    assert h_n.shape == (1, B, H) and c_n.shape == (1, B, H)
    # bf16 MXU operands (f32 accumulate) -> loosened tolerance vs. the f32 reference.
    assert jnp.allclose(scores, ref_scores, atol=2e-2, rtol=2e-2)
    assert jnp.allclose(h_n, ref_h, atol=2e-2, rtol=2e-2)
    assert jnp.allclose(c_n, ref_c, atol=2e-2, rtol=2e-2)

    print("KERNEL_OK")
</pallas_src>

<mosaic_0001>
module attributes {stable_mosaic.version = 11 : i64} {
  func.func @char_decoder_kernel(%arg0: memref<64x1xi32, #tpu.memory_space<vmem>>, %arg1: memref<128x128xbf16, #tpu.memory_space<vmem>>, %arg2: memref<32x128xbf16, #tpu.memory_space<vmem>>, %arg3: memref<32x128xbf16, #tpu.memory_space<vmem>>, %arg4: memref<1x128xf32, #tpu.memory_space<vmem>>, %arg5: memref<8x32xf32, #tpu.memory_space<vmem>>, %arg6: memref<8x32xf32, #tpu.memory_space<vmem>>, %arg7: memref<64x128xf32, #tpu.memory_space<vmem>>, %arg8: memref<8x32xf32, #tpu.memory_space<vmem>>, %arg9: memref<8x32xf32, #tpu.memory_space<vmem>>, %arg10: memref<64x32xf32, #tpu.memory_space<vmem>>) attributes {dimension_semantics = [], scalar_prefetch = 0 : i64, scratch_operands = 1 : i64, tpu.core_type = #tpu.core_type<tc>} {
    %c0 = arith.constant 0 : index
    %c0_0 = arith.constant 0 : index
    %0 = vector.load %arg0[%c0, %c0_0] : memref<64x1xi32, #tpu.memory_space<vmem>>, vector<64x1xi32>
    %1 = tpu.iota {dimensions = array<i32: 1>} : vector<64x128xi32>
    %2 = vector.broadcast %0 : vector<64x1xi32> to vector<64x128xi32>
    %3 = arith.cmpi eq, %1, %2 : vector<64x128xi32>
    %cst = arith.constant 1.000000e+00 : f32
    %cst_1 = arith.constant 0.000000e+00 : f32
    %4 = vector.broadcast %cst : f32 to vector<64x128xf32>
    %5 = vector.broadcast %cst_1 : f32 to vector<64x128xf32>
    %6 = arith.select %3, %4, %5 : vector<64x128xi1>, vector<64x128xf32>
    %7 = arith.truncf %6 : vector<64x128xf32> to vector<64x128xbf16>
    %c0_2 = arith.constant 0 : index
    %c0_3 = arith.constant 0 : index
    %8 = vector.load %arg1[%c0_2, %c0_3] : memref<128x128xbf16, #tpu.memory_space<vmem>>, vector<128x128xbf16>
    %cst_4 = arith.constant dense<0.000000e+00> : vector<64x128xf32>
    %9 = tpu.matmul %7, %8, %cst_4 {dimension_numbers = #tpu.dot_dimension_numbers<[1], [0], [0], [1], [0, 0, 1, 1], [], []>} : vector<64x128xbf16>, vector<128x128xbf16>, vector<64x128xf32> -> vector<64x128xf32>
    %c0_5 = arith.constant 0 : index
    %c0_6 = arith.constant 0 : index
    %10 = vector.load %arg2[%c0_5, %c0_6] : memref<32x128xbf16, #tpu.memory_space<vmem>>, vector<32x128xbf16>
    %c0_7 = arith.constant 0 : index
    %c0_8 = arith.constant 0 : index
    %11 = vector.load %arg5[%c0_7, %c0_8] : memref<8x32xf32, #tpu.memory_space<vmem>>, vector<8x32xf32>
    %c0_9 = arith.constant 0 : index
    %c0_10 = arith.constant 0 : index
    %12 = vector.load %arg6[%c0_9, %c0_10] : memref<8x32xf32, #tpu.memory_space<vmem>>, vector<8x32xf32>
    %13 = vector.extract_strided_slice %9 {offsets = [0, 0], sizes = [8, 128], strides = [1, 1]} : vector<64x128xf32> to vector<8x128xf32>
    %14 = arith.truncf %11 : vector<8x32xf32> to vector<8x32xbf16>
    %cst_11 = arith.constant dense<0.000000e+00> : vector<8x128xf32>
    %15 = tpu.matmul %14, %10, %cst_11 {dimension_numbers = #tpu.dot_dimension_numbers<[1], [0], [0], [1], [0, 0, 1, 1], [], []>} : vector<8x32xbf16>, vector<32x128xbf16>, vector<8x128xf32> -> vector<8x128xf32>
    %16 = arith.addf %13, %15 : vector<8x128xf32>
    %17 = arith.negf %16 : vector<8x128xf32>
    %18 = math.exp %17 : vector<8x128xf32>
    %cst_12 = arith.constant 1.000000e+00 : f32
    %19 = vector.broadcast %cst_12 : f32 to vector<8x128xf32>
    %20 = arith.addf %19, %18 : vector<8x128xf32>
    %21 = arith.divf %19, %20 : vector<8x128xf32>
    %22 = math.tanh %16 : vector<8x128xf32>
    %23 = vector.extract_strided_slice %21 {offsets = [0, 0], sizes = [8, 32], strides = [1, 1]} : vector<8x128xf32> to vector<8x32xf32>
    %24 = vector.extract_strided_slice %21 {offsets = [0, 32], sizes = [8, 32], strides = [1, 1]} : vector<8x128xf32> to vector<8x32xf32>
    %25 = vector.extract_strided_slice %21 {offsets = [0, 96], sizes = [8, 32], strides = [1, 1]} : vector<8x128xf32> to vector<8x32xf32>
    %26 = vector.extract_strided_slice %22 {offsets = [0, 64], sizes = [8, 32], strides = [1, 1]} : vector<8x128xf32> to vector<8x32xf32>
    %27 = arith.mulf %24, %12 : vector<8x32xf32>
    %28 = arith.mulf %23, %26 : vector<8x32xf32>
    %29 = arith.addf %27, %28 : vector<8x32xf32>
    %30 = math.tanh %29 : vector<8x32xf32>
    %31 = arith.mulf %25, %30 : vector<8x32xf32>
    %c0_13 = arith.constant 0 : index
    %c0_14 = arith.constant 0 : index
    %32 = vector.load %arg10[%c0_13, %c0_14] : memref<64x32xf32, #tpu.memory_space<vmem>>, vector<8x32xf32>
    tpu.vector_store %arg10[%c0_13, %c0_14], %31 {strides = array<i32>} : memref<64x32xf32, #tpu.memory_space<vmem>>, vector<8x32xf32>,
    %33 = vector.extract_strided_slice %9 {offsets = [8, 0], sizes = [8, 128], strides = [1, 1]} : vector<64x128xf32> to vector<8x128xf32>
    %34 = arith.truncf %31 : vector<8x32xf32> to vector<8x32xbf16>
    %cst_15 = arith.constant dense<0.000000e+00> : vector<8x128xf32>
    %35 = tpu.matmul %34, %10, %cst_15 {dimension_numbers = #tpu.dot_dimension_numbers<[1], [0], [0], [1], [0, 0, 1, 1], [], []>} : vector<8x32xbf16>, vector<32x128xbf16>, vector<8x128xf32> -> vector<8x128xf32>
    %36 = arith.addf %33, %35 : vector<8x128xf32>
    %37 = arith.negf %36 : vector<8x128xf32>
    %38 = math.exp %37 : vector<8x128xf32>
    %cst_16 = arith.constant 1.000000e+00 : f32
    %39 = vector.broadcast %cst_16 : f32 to vector<8x128xf32>
    %40 = arith.addf %39, %38 : vector<8x128xf32>
    %41 = arith.divf %39, %40 : vector<8x128xf32>
    %42 = math.tanh %36 : vector<8x128xf32>
    %43 = vector.extract_strided_slice %41 {offsets = [0, 0], sizes = [8, 32], strides = [1, 1]} : vector<8x128xf32> to vector<8x32xf32>
    %44 = vector.extract_strided_slice %41 {offsets = [0, 32], sizes = [8, 32], strides = [1, 1]} : vector<8x128xf32> to vector<8x32xf32>
    %45 = vector.extract_strided_slice %41 {offsets = [0, 96], sizes = [8, 32], strides = [1, 1]} : vector<8x128xf32> to vector<8x32xf32>
    %46 = vector.extract_strided_slice %42 {offsets = [0, 64], sizes = [8, 32], strides = [1, 1]} : vector<8x128xf32> to vector<8x32xf32>
    %47 = arith.mulf %44, %29 : vector<8x32xf32>
    %48 = arith.mulf %43, %46 : vector<8x32xf32>
    %49 = arith.addf %47, %48 : vector<8x32xf32>
    %50 = math.tanh %49 : vector<8x32xf32>
    %51 = arith.mulf %45, %50 : vector<8x32xf32>
    %c8 = arith.constant 8 : index
    %c0_17 = arith.constant 0 : index
    %52 = vector.load %arg10[%c8, %c0_17] : memref<64x32xf32, #tpu.memory_space<vmem>>, vector<8x32xf32>
    tpu.vector_store %arg10[%c8, %c0_17], %51 {strides = array<i32>} : memref<64x32xf32, #tpu.memory_space<vmem>>, vector<8x32xf32>,
    %53 = vector.extract_strided_slice %9 {offsets = [16, 0], sizes = [8, 128], strides = [1, 1]} : vector<64x128xf32> to vector<8x128xf32>
    %54 = arith.truncf %51 : vector<8x32xf32> to vector<8x32xbf16>
    %cst_18 = arith.constant dense<0.000000e+00> : vector<8x128xf32>
    %55 = tpu.matmul %54, %10, %cst_18 {dimension_numbers = #tpu.dot_dimension_numbers<[1], [0], [0], [1], [0, 0, 1, 1], [], []>} : vector<8x32xbf16>, vector<32x128xbf16>, vector<8x128xf32> -> vector<8x128xf32>
    %56 = arith.addf %53, %55 : vector<8x128xf32>
    %57 = arith.negf %56 : vector<8x128xf32>
    %58 = math.exp %57 : vector<8x128xf32>
    %cst_19 = arith.constant 1.000000e+00 : f32
    %59 = vector.broadcast %cst_19 : f32 to vector<8x128xf32>
    %60 = arith.addf %59, %58 : vector<8x128xf32>
    %61 = arith.divf %59, %60 : vector<8x128xf32>
    %62 = math.tanh %56 : vector<8x128xf32>
    %63 = vector.extract_strided_slice %61 {offsets = [0, 0], sizes = [8, 32], strides = [1, 1]} : vector<8x128xf32> to vector<8x32xf32>
    %64 = vector.extract_strided_slice %61 {offsets = [0, 32], sizes = [8, 32], strides = [1, 1]} : vector<8x128xf32> to vector<8x32xf32>
    %65 = vector.extract_strided_slice %61 {offsets = [0, 96], sizes = [8, 32], strides = [1, 1]} : vector<8x128xf32> to vector<8x32xf32>
    %66 = vector.extract_strided_slice %62 {offsets = [0, 64], sizes = [8, 32], strides = [1, 1]} : vector<8x128xf32> to vector<8x32xf32>
    %67 = arith.mulf %64, %49 : vector<8x32xf32>
    %68 = arith.mulf %63, %66 : vector<8x32xf32>
    %69 = arith.addf %67, %68 : vector<8x32xf32>
    %70 = math.tanh %69 : vector<8x32xf32>
    %71 = arith.mulf %65, %70 : vector<8x32xf32>
    %c16 = arith.constant 16 : index
    %c0_20 = arith.constant 0 : index
    %72 = vector.load %arg10[%c16, %c0_20] : memref<64x32xf32, #tpu.memory_space<vmem>>, vector<8x32xf32>
    tpu.vector_store %arg10[%c16, %c0_20], %71 {strides = array<i32>} : memref<64x32xf32, #tpu.memory_space<vmem>>, vector<8x32xf32>,
    %73 = vector.extract_strided_slice %9 {offsets = [24, 0], sizes = [8, 128], strides = [1, 1]} : vector<64x128xf32> to vector<8x128xf32>
    %74 = arith.truncf %71 : vector<8x32xf32> to vector<8x32xbf16>
    %cst_21 = arith.constant dense<0.000000e+00> : vector<8x128xf32>
    %75 = tpu.matmul %74, %10, %cst_21 {dimension_numbers = #tpu.dot_dimension_numbers<[1], [0], [0], [1], [0, 0, 1, 1], [], []>} : vector<8x32xbf16>, vector<32x128xbf16>, vector<8x128xf32> -> vector<8x128xf32>
    %76 = arith.addf %73, %75 : vector<8x128xf32>
    %77 = arith.negf %76 : vector<8x128xf32>
    %78 = math.exp %77 : vector<8x128xf32>
    %cst_22 = arith.constant 1.000000e+00 : f32
    %79 = vector.broadcast %cst_22 : f32 to vector<8x128xf32>
    %80 = arith.addf %79, %78 : vector<8x128xf32>
    %81 = arith.divf %79, %80 : vector<8x128xf32>
    %82 = math.tanh %76 : vector<8x128xf32>
    %83 = vector.extract_strided_slice %81 {offsets = [0, 0], sizes = [8, 32], strides = [1, 1]} : vector<8x128xf32> to vector<8x32xf32>
    %84 = vector.extract_strided_slice %81 {offsets = [0, 32], sizes = [8, 32], strides = [1, 1]} : vector<8x128xf32> to vector<8x32xf32>
    %85 = vector.extract_strided_slice %81 {offsets = [0, 96], sizes = [8, 32], strides = [1, 1]} : vector<8x128xf32> to vector<8x32xf32>
    %86 = vector.extract_strided_slice %82 {offsets = [0, 64], sizes = [8, 32], strides = [1, 1]} : vector<8x128xf32> to vector<8x32xf32>
    %87 = arith.mulf %84, %69 : vector<8x32xf32>
    %88 = arith.mulf %83, %86 : vector<8x32xf32>
    %89 = arith.addf %87, %88 : vector<8x32xf32>
    %90 = math.tanh %89 : vector<8x32xf32>
    %91 = arith.mulf %85, %90 : vector<8x32xf32>
    %c24 = arith.constant 24 : index
    %c0_23 = arith.constant 0 : index
    %92 = vector.load %arg10[%c24, %c0_23] : memref<64x32xf32, #tpu.memory_space<vmem>>, vector<8x32xf32>
    tpu.vector_store %arg10[%c24, %c0_23], %91 {strides = array<i32>} : memref<64x32xf32, #tpu.memory_space<vmem>>, vector<8x32xf32>,
    %93 = vector.extract_strided_slice %9 {offsets = [32, 0], sizes = [8, 128], strides = [1, 1]} : vector<64x128xf32> to vector<8x128xf32>
    %94 = arith.truncf %91 : vector<8x32xf32> to vector<8x32xbf16>
    %cst_24 = arith.constant dense<0.000000e+00> : vector<8x128xf32>
    %95 = tpu.matmul %94, %10, %cst_24 {dimension_numbers = #tpu.dot_dimension_numbers<[1], [0], [0], [1], [0, 0, 1, 1], [], []>} : vector<8x32xbf16>, vector<32x128xbf16>, vector<8x128xf32> -> vector<8x128xf32>
    %96 = arith.addf %93, %95 : vector<8x128xf32>
    %97 = arith.negf %96 : vector<8x128xf32>
    %98 = math.exp %97 : vector<8x128xf32>
    %cst_25 = arith.constant 1.000000e+00 : f32
    %99 = vector.broadcast %cst_25 : f32 to vector<8x128xf32>
    %100 = arith.addf %99, %98 : vector<8x128xf32>
    %101 = arith.divf %99, %100 : vector<8x128xf32>
    %102 = math.tanh %96 : vector<8x128xf32>
    %103 = vector.extract_strided_slice %101 {offsets = [0, 0], sizes = [8, 32], strides = [1, 1]} : vector<8x128xf32> to vector<8x32xf32>
    %104 = vector.extract_strided_slice %101 {offsets = [0, 32], sizes = [8, 32], strides = [1, 1]} : vector<8x128xf32> to vector<8x32xf32>
    %105 = vector.extract_strided_slice %101 {offsets = [0, 96], sizes = [8, 32], strides = [1, 1]} : vector<8x128xf32> to vector<8x32xf32>
    %106 = vector.extract_strided_slice %102 {offsets = [0, 64], sizes = [8, 32], strides = [1, 1]} : vector<8x128xf32> to vector<8x32xf32>
    %107 = arith.mulf %104, %89 : vector<8x32xf32>
    %108 = arith.mulf %103, %106 : vector<8x32xf32>
    %109 = arith.addf %107, %108 : vector<8x32xf32>
    %110 = math.tanh %109 : vector<8x32xf32>
    %111 = arith.mulf %105, %110 : vector<8x32xf32>
    %c32 = arith.constant 32 : index
    %c0_26 = arith.constant 0 : index
    %112 = vector.load %arg10[%c32, %c0_26] : memref<64x32xf32, #tpu.memory_space<vmem>>, vector<8x32xf32>
    tpu.vector_store %arg10[%c32, %c0_26], %111 {strides = array<i32>} : memref<64x32xf32, #tpu.memory_space<vmem>>, vector<8x32xf32>,
    %113 = vector.extract_strided_slice %9 {offsets = [40, 0], sizes = [8, 128], strides = [1, 1]} : vector<64x128xf32> to vector<8x128xf32>
    %114 = arith.truncf %111 : vector<8x32xf32> to vector<8x32xbf16>
    %cst_27 = arith.constant dense<0.000000e+00> : vector<8x128xf32>
    %115 = tpu.matmul %114, %10, %cst_27 {dimension_numbers = #tpu.dot_dimension_numbers<[1], [0], [0], [1], [0, 0, 1, 1], [], []>} : vector<8x32xbf16>, vector<32x128xbf16>, vector<8x128xf32> -> vector<8x128xf32>
    %116 = arith.addf %113, %115 : vector<8x128xf32>
    %117 = arith.negf %116 : vector<8x128xf32>
    %118 = math.exp %117 : vector<8x128xf32>
    %cst_28 = arith.constant 1.000000e+00 : f32
    %119 = vector.broadcast %cst_28 : f32 to vector<8x128xf32>
    %120 = arith.addf %119, %118 : vector<8x128xf32>
    %121 = arith.divf %119, %120 : vector<8x128xf32>
    %122 = math.tanh %116 : vector<8x128xf32>
    %123 = vector.extract_strided_slice %121 {offsets = [0, 0], sizes = [8, 32], strides = [1, 1]} : vector<8x128xf32> to vector<8x32xf32>
    %124 = vector.extract_strided_slice %121 {offsets = [0, 32], sizes = [8, 32], strides = [1, 1]} : vector<8x128xf32> to vector<8x32xf32>
    %125 = vector.extract_strided_slice %121 {offsets = [0, 96], sizes = [8, 32], strides = [1, 1]} : vector<8x128xf32> to vector<8x32xf32>
    %126 = vector.extract_strided_slice %122 {offsets = [0, 64], sizes = [8, 32], strides = [1, 1]} : vector<8x128xf32> to vector<8x32xf32>
    %127 = arith.mulf %124, %109 : vector<8x32xf32>
    %128 = arith.mulf %123, %126 : vector<8x32xf32>
    %129 = arith.addf %127, %128 : vector<8x32xf32>
    %130 = math.tanh %129 : vector<8x32xf32>
    %131 = arith.mulf %125, %130 : vector<8x32xf32>
    %c40 = arith.constant 40 : index
    %c0_29 = arith.constant 0 : index
    %132 = vector.load %arg10[%c40, %c0_29] : memref<64x32xf32, #tpu.memory_space<vmem>>, vector<8x32xf32>
    tpu.vector_store %arg10[%c40, %c0_29], %131 {strides = array<i32>} : memref<64x32xf32, #tpu.memory_space<vmem>>, vector<8x32xf32>,
    %133 = vector.extract_strided_slice %9 {offsets = [48, 0], sizes = [8, 128], strides = [1, 1]} : vector<64x128xf32> to vector<8x128xf32>
    %134 = arith.truncf %131 : vector<8x32xf32> to vector<8x32xbf16>
    %cst_30 = arith.constant dense<0.000000e+00> : vector<8x128xf32>
    %135 = tpu.matmul %134, %10, %cst_30 {dimension_numbers = #tpu.dot_dimension_numbers<[1], [0], [0], [1], [0, 0, 1, 1], [], []>} : vector<8x32xbf16>, vector<32x128xbf16>, vector<8x128xf32> -> vector<8x128xf32>
    %136 = arith.addf %133, %135 : vector<8x128xf32>
    %137 = arith.negf %136 : vector<8x128xf32>
    %138 = math.exp %137 : vector<8x128xf32>
    %cst_31 = arith.constant 1.000000e+00 : f32
    %139 = vector.broadcast %cst_31 : f32 to vector<8x128xf32>
    %140 = arith.addf %139, %138 : vector<8x128xf32>
    %141 = arith.divf %139, %140 : vector<8x128xf32>
    %142 = math.tanh %136 : vector<8x128xf32>
    %143 = vector.extract_strided_slice %141 {offsets = [0, 0], sizes = [8, 32], strides = [1, 1]} : vector<8x128xf32> to vector<8x32xf32>
    %144 = vector.extract_strided_slice %141 {offsets = [0, 32], sizes = [8, 32], strides = [1, 1]} : vector<8x128xf32> to vector<8x32xf32>
    %145 = vector.extract_strided_slice %141 {offsets = [0, 96], sizes = [8, 32], strides = [1, 1]} : vector<8x128xf32> to vector<8x32xf32>
    %146 = vector.extract_strided_slice %142 {offsets = [0, 64], sizes = [8, 32], strides = [1, 1]} : vector<8x128xf32> to vector<8x32xf32>
    %147 = arith.mulf %144, %129 : vector<8x32xf32>
    %148 = arith.mulf %143, %146 : vector<8x32xf32>
    %149 = arith.addf %147, %148 : vector<8x32xf32>
    %150 = math.tanh %149 : vector<8x32xf32>
    %151 = arith.mulf %145, %150 : vector<8x32xf32>
    %c48 = arith.constant 48 : index
    %c0_32 = arith.constant 0 : index
    %152 = vector.load %arg10[%c48, %c0_32] : memref<64x32xf32, #tpu.memory_space<vmem>>, vector<8x32xf32>
    tpu.vector_store %arg10[%c48, %c0_32], %151 {strides = array<i32>} : memref<64x32xf32, #tpu.memory_space<vmem>>, vector<8x32xf32>,
    %153 = vector.extract_strided_slice %9 {offsets = [56, 0], sizes = [8, 128], strides = [1, 1]} : vector<64x128xf32> to vector<8x128xf32>
    %154 = arith.truncf %151 : vector<8x32xf32> to vector<8x32xbf16>
    %cst_33 = arith.constant dense<0.000000e+00> : vector<8x128xf32>
    %155 = tpu.matmul %154, %10, %cst_33 {dimension_numbers = #tpu.dot_dimension_numbers<[1], [0], [0], [1], [0, 0, 1, 1], [], []>} : vector<8x32xbf16>, vector<32x128xbf16>, vector<8x128xf32> -> vector<8x128xf32>
    %156 = arith.addf %153, %155 : vector<8x128xf32>
    %157 = arith.negf %156 : vector<8x128xf32>
    %158 = math.exp %157 : vector<8x128xf32>
    %cst_34 = arith.constant 1.000000e+00 : f32
    %159 = vector.broadcast %cst_34 : f32 to vector<8x128xf32>
    %160 = arith.addf %159, %158 : vector<8x128xf32>
    %161 = arith.divf %159, %160 : vector<8x128xf32>
    %162 = math.tanh %156 : vector<8x128xf32>
    %163 = vector.extract_strided_slice %161 {offsets = [0, 0], sizes = [8, 32], strides = [1, 1]} : vector<8x128xf32> to vector<8x32xf32>
    %164 = vector.extract_strided_slice %161 {offsets = [0, 32], sizes = [8, 32], strides = [1, 1]} : vector<8x128xf32> to vector<8x32xf32>
    %165 = vector.extract_strided_slice %161 {offsets = [0, 96], sizes = [8, 32], strides = [1, 1]} : vector<8x128xf32> to vector<8x32xf32>
    %166 = vector.extract_strided_slice %162 {offsets = [0, 64], sizes = [8, 32], strides = [1, 1]} : vector<8x128xf32> to vector<8x32xf32>
    %167 = arith.mulf %164, %149 : vector<8x32xf32>
    %168 = arith.mulf %163, %166 : vector<8x32xf32>
    %169 = arith.addf %167, %168 : vector<8x32xf32>
    %170 = math.tanh %169 : vector<8x32xf32>
    %171 = arith.mulf %165, %170 : vector<8x32xf32>
    %c56 = arith.constant 56 : index
    %c0_35 = arith.constant 0 : index
    %172 = vector.load %arg10[%c56, %c0_35] : memref<64x32xf32, #tpu.memory_space<vmem>>, vector<8x32xf32>
    tpu.vector_store %arg10[%c56, %c0_35], %171 {strides = array<i32>} : memref<64x32xf32, #tpu.memory_space<vmem>>, vector<8x32xf32>,
    %c0_36 = arith.constant 0 : index
    %c0_37 = arith.constant 0 : index
    %173 = vector.load %arg8[%c0_36, %c0_37] : memref<8x32xf32, #tpu.memory_space<vmem>>, vector<8x32xf32>
    tpu.vector_store %arg8[%c0_36, %c0_37], %171 {strides = array<i32>} : memref<8x32xf32, #tpu.memory_space<vmem>>, vector<8x32xf32>,
    %c0_38 = arith.constant 0 : index
    %c0_39 = arith.constant 0 : index
    %174 = vector.load %arg9[%c0_38, %c0_39] : memref<8x32xf32, #tpu.memory_space<vmem>>, vector<8x32xf32>
    tpu.vector_store %arg9[%c0_38, %c0_39], %169 {strides = array<i32>} : memref<8x32xf32, #tpu.memory_space<vmem>>, vector<8x32xf32>,
    %c0_40 = arith.constant 0 : index
    %c0_41 = arith.constant 0 : index
    %175 = vector.load %arg10[%c0_40, %c0_41] : memref<64x32xf32, #tpu.memory_space<vmem>>, vector<64x32xf32>
    %176 = arith.truncf %175 : vector<64x32xf32> to vector<64x32xbf16>
    %c0_42 = arith.constant 0 : index
    %c0_43 = arith.constant 0 : index
    %177 = vector.load %arg3[%c0_42, %c0_43] : memref<32x128xbf16, #tpu.memory_space<vmem>>, vector<32x128xbf16>
    %cst_44 = arith.constant dense<0.000000e+00> : vector<64x128xf32>
    %178 = tpu.matmul %176, %177, %cst_44 {dimension_numbers = #tpu.dot_dimension_numbers<[1], [0], [0], [1], [0, 0, 1, 1], [], []>} : vector<64x32xbf16>, vector<32x128xbf16>, vector<64x128xf32> -> vector<64x128xf32>
    %c0_45 = arith.constant 0 : index
    %c0_46 = arith.constant 0 : index
    %179 = vector.load %arg4[%c0_45, %c0_46] : memref<1x128xf32, #tpu.memory_space<vmem>>, vector<1x128xf32>
    %180 = vector.broadcast %179 : vector<1x128xf32> to vector<64x128xf32>
    %181 = arith.addf %178, %180 : vector<64x128xf32>
    %c0_47 = arith.constant 0 : index
    %c0_48 = arith.constant 0 : index
    %182 = vector.load %arg7[%c0_47, %c0_48] : memref<64x128xf32, #tpu.memory_space<vmem>>, vector<64x128xf32>
    tpu.vector_store %arg7[%c0_47, %c0_48], %181 {strides = array<i32>} : memref<64x128xf32, #tpu.memory_space<vmem>>, vector<64x128xf32>,
    return
  }
}

</mosaic_0001>

<llo_original>
// kernel: tpu_custom_call.1
$region0: #{tpu_custom_call.1}
  #allocation0 [shape = 'u32[]', space=smem, size = 0x4, offset = 0x4, fixed_abs, tag = 'smem constant byte address 0x4 - core index']
  #allocation1 [shape = 'u32[144,128]{1,0:T(1,128)}', space=vmem, size = 0x12000, scoped, tag = 'internal scratch']
  #allocation2 [shape = 'f32[64,32]{1,0:T(8,128)}', space=vmem, size = 0x8000, scoped, tag = 'scratch operand']
  %s0 = inlined_call_operand.vmem [shape: s32[64,1], index: 0, kind: input, shape index: {}]
  %s1 = inlined_call_operand.vmem [shape: bf16[128,128], index: 1, kind: input, shape index: {}]
  %s2 = inlined_call_operand.hbm [shape: bf16[32,128], index: 2, kind: input, shape index: {}]
  %s3 = inlined_call_operand.hbm [shape: bf16[32,128], index: 3, kind: input, shape index: {}]
  %s4 = inlined_call_operand.hbm [shape: f32[1,128], index: 4, kind: input, shape index: {}]
  %s5 = inlined_call_operand.vmem [shape: f32[8,32], index: 5, kind: input, shape index: {}]
  %s6 = inlined_call_operand.hbm [shape: f32[8,32], index: 6, kind: input, shape index: {}]
  %s7 = inlined_call_operand.hbm [shape: f32[64,128], index: 7, kind: output, shape index: {0}]
  %s8 = inlined_call_operand.hbm [shape: f32[8,32], index: 8, kind: output, shape index: {1}]
  %s9 = inlined_call_operand.hbm [shape: f32[8,32], index: 9, kind: output, shape index: {2}]
  %10 = xla_tuple %s7, %s8, %s9
  %s11 = sld [smem:[#allocation0]]
  $region70: #{tpu_custom_call.1} parent=0
    _
  %s13 = ssub.s32 1, %s11
  %s14 = scalar_select 0, %s13, %s11
  $region1: #{tpu_custom_call.1} parent=0
    #allocation3 [shape = 'u8[8192]{0}', space=vmem, size = 0x2000, scoped, tag = 'input window, operand 2, single buffered']
    #allocation4 [shape = 's32[1]{0}', space=sflag, size = 0x4, scoped, tag = 'scoped memory for tpu_custom_call.1']
    #allocation5 [shape = 's32[1]{0}', space=sflag, size = 0x4, scoped, tag = 'scoped memory for tpu_custom_call.1']
    #allocation6 [shape = 'u8[8192]{0}', space=vmem, size = 0x2000, scoped, tag = 'input window, operand 3, single buffered']
    #allocation7 [shape = 's32[1]{0}', space=sflag, size = 0x4, scoped, tag = 'scoped memory for tpu_custom_call.1']
    #allocation8 [shape = 'u8[512]{0}', space=vmem, size = 0x400, scoped, tag = 'input window, operand 4, single buffered']
    #allocation9 [shape = 'u8[4096]{0}', space=vmem, size = 0x1000, scoped, tag = 'input window, operand 6, single buffered']
    #allocation10 [shape = 's32[1]{0}', space=sflag, size = 0x4, scoped, tag = 'scoped memory for tpu_custom_call.1']
    #allocation11 [shape = 'u8[32768]{0}', space=vmem, size = 0x8000, scoped, tag = 'output window, operand 0, single buffered']
    #allocation12 [shape = 'u8[4096]{0}', space=vmem, size = 0x1000, scoped, tag = 'output window, operand 1, single buffered']
    #allocation13 [shape = 's32[1]{0}', space=sflag, size = 0x4, scoped, tag = 'scoped memory for tpu_custom_call.1']
    #allocation14 [shape = 'u8[4096]{0}', space=vmem, size = 0x1000, scoped, tag = 'output window, operand 2, single buffered']
    %15 = vsyncpa [#allocation4], 0
    %16 = vsyncpa [#allocation7], 0
    %17 = vsyncpa [#allocation10], 0
    %18 = vsyncpa [#allocation5], 0
    %19 = vsyncpa [#allocation13], 0
    // Predicated region
    $region2: #{tpu_custom_call.1} parent=1 // pred_check
      _
    $region3: #{tpu_custom_call.1} parent=1 // pred_check_branch
      %21 = sbr.rel (0) target = $region5
    $region4: #{tpu_custom_call.1} parent=1 // pred_region
      _
    $region5: #{tpu_custom_call.1} parent=1 // pred_fallthru
      _
    // Predicated region
    $region6: #{tpu_custom_call.1} parent=1 // pred_check
      _
    $region7: #{tpu_custom_call.1} parent=1 // pred_check_branch
      %23 = sbr.rel (0) target = $region9
    $region8: #{tpu_custom_call.1} parent=1 // pred_region
      _
    $region9: #{tpu_custom_call.1} parent=1 // pred_fallthru
      _
    // Predicated region
    $region10: #{tpu_custom_call.1} parent=1 // pred_check
      _
    $region11: #{tpu_custom_call.1} parent=1 // pred_check_branch
      %25 = sbr.rel (0) target = $region13
    $region12: #{tpu_custom_call.1} parent=1 // pred_region
      %s27 = ssub.s32 256, 256
      %28 = vsyncadd [#allocation4], %s27
      %s29 = sshll.u32 [#allocation3], 4
      %s30 = int_to_ptr.vmem [resolvable:$true] %s29
      %35 = dma.hbm_to_vmem [thread:$0]  %s2, 256, %s30, [#allocation4], 64, 64, 4
    $region13: #{tpu_custom_call.1} parent=1 // pred_fallthru
      _
    // Predicated region
    $region14: #{tpu_custom_call.1} parent=1 // pred_check
      _
    $region15: #{tpu_custom_call.1} parent=1 // pred_check_branch
      %37 = sbr.rel (0) target = $region17
    $region16: #{tpu_custom_call.1} parent=1 // pred_region
      %s39 = ssub.s32 256, 256
      %40 = vsyncadd [#allocation7], %s39
      %s41 = sshll.u32 [#allocation6], 4
      %s42 = int_to_ptr.vmem [resolvable:$true] %s41
      %47 = dma.hbm_to_vmem [thread:$0]  %s3, 256, %s42, [#allocation7], 64, 64, 4
    $region17: #{tpu_custom_call.1} parent=1 // pred_fallthru
      _
    // Predicated region
    $region18: #{tpu_custom_call.1} parent=1 // pred_check
      _
    $region19: #{tpu_custom_call.1} parent=1 // pred_check_branch
      %49 = sbr.rel (0) target = $region21
    $region20: #{tpu_custom_call.1} parent=1 // pred_region
      %s51 = ssub.s32 16, 16
      %52 = vsyncadd [#allocation7], %s51
      %s54 = sshll.u32 [#allocation8], 4
      %s55 = int_to_ptr.vmem [resolvable:$true] %s54
      %57 = dma.hbm_to_vmem [thread:$0]  %s4, 16, %s55, [#allocation7]
    $region21: #{tpu_custom_call.1} parent=1 // pred_fallthru
      _
    // Predicated region
    $region22: #{tpu_custom_call.1} parent=1 // pred_check
      _
    $region23: #{tpu_custom_call.1} parent=1 // pred_check_branch
      %59 = sbr.rel (0) target = $region25
    $region24: #{tpu_custom_call.1} parent=1 // pred_region
      _
    $region25: #{tpu_custom_call.1} parent=1 // pred_fallthru
      _
    // Predicated region
    $region26: #{tpu_custom_call.1} parent=1 // pred_check
      _
    $region27: #{tpu_custom_call.1} parent=1 // pred_check_branch
      %61 = sbr.rel (0) target = $region29
    $region28: #{tpu_custom_call.1} parent=1 // pred_region
      %s63 = ssub.s32 128, 128
      %64 = vsyncadd [#allocation10], %s63
      %s66 = sshll.u32 [#allocation9], 4
      %s67 = int_to_ptr.vmem [resolvable:$true] %s66
      %69 = dma.hbm_to_vmem [thread:$0]  %s6, 128, %s67, [#allocation10]
    $region29: #{tpu_custom_call.1} parent=1 // pred_fallthru
      _
    // Predicated region
    $region30: #{tpu_custom_call.1} parent=1 // pred_check
      _
    $region31: #{tpu_custom_call.1} parent=1 // pred_check_branch
      %71 = sbr.rel (0) target = $region33
    $region32: #{tpu_custom_call.1} parent=1 // pred_region
      %72 = dma.done [#allocation4], 256
    $region33: #{tpu_custom_call.1} parent=1 // pred_fallthru
      _
    // Predicated region
    $region34: #{tpu_custom_call.1} parent=1 // pred_check
      _
    $region35: #{tpu_custom_call.1} parent=1 // pred_check_branch
      %74 = sbr.rel (0) target = $region37
    $region36: #{tpu_custom_call.1} parent=1 // pred_region
      %75 = dma.done [#allocation7], 256
    $region37: #{tpu_custom_call.1} parent=1 // pred_fallthru
      _
    // Predicated region
    $region38: #{tpu_custom_call.1} parent=1 // pred_check
      _
    $region39: #{tpu_custom_call.1} parent=1 // pred_check_branch
      %77 = sbr.rel (0) target = $region41
    $region40: #{tpu_custom_call.1} parent=1 // pred_region
      %78 = dma.done [#allocation7], 16
    $region41: #{tpu_custom_call.1} parent=1 // pred_fallthru
      _
    // Predicated region
    $region42: #{tpu_custom_call.1} parent=1 // pred_check
      _
    $region43: #{tpu_custom_call.1} parent=1 // pred_check_branch
      %80 = sbr.rel (0) target = $region45
    $region44: #{tpu_custom_call.1} parent=1 // pred_region
      %81 = dma.done [#allocation10], 128
    $region45: #{tpu_custom_call.1} parent=1 // pred_fallthru
      _
    %v83 = vld [vmem:[%s0] sm:$0xff]
    %v84 = vld [vmem:[%s0 + $0x8] sm:$0xff]
    %v85 = vld [vmem:[%s0 + $0x10] sm:$0xff]
    %v86 = vld [vmem:[%s0 + $0x18] sm:$0xff]
    %v87 = vld [vmem:[%s0 + $0x20] sm:$0xff]
    %v88 = vld [vmem:[%s0 + $0x28] sm:$0xff]
    %v89 = vld [vmem:[%s0 + $0x30] sm:$0xff]
    %v90 = vld [vmem:[%s0 + $0x38] sm:$0xff]
    %v91 = vlaneseq
    %v92 = vand.u32 %v91, 127
    %93 = vset.pattern.permute.xlu0 0
    %94 = vperm.xlu0 %93, %v83
    %v95 = vpop.permute.xlu0 %94
    %96 = vset.pattern.permute.xlu0 0
    %97 = vperm.xlu0 %96, %v84
    %v98 = vpop.permute.xlu0 %97
    %99 = vset.pattern.permute.xlu0 0
    %100 = vperm.xlu0 %99, %v85
    %v101 = vpop.permute.xlu0 %100
    %102 = vset.pattern.permute.xlu0 0
    %103 = vperm.xlu0 %102, %v86
    %v104 = vpop.permute.xlu0 %103
    %105 = vset.pattern.permute.xlu0 0
    %106 = vperm.xlu0 %105, %v87
    %v107 = vpop.permute.xlu0 %106
    %108 = vset.pattern.permute.xlu0 0
    %109 = vperm.xlu0 %108, %v88
    %v110 = vpop.permute.xlu0 %109
    %111 = vset.pattern.permute.xlu0 0
    %112 = vperm.xlu0 %111, %v89
    %v113 = vpop.permute.xlu0 %112
    %114 = vset.pattern.permute.xlu0 0
    %115 = vperm.xlu0 %114, %v90
    %v116 = vpop.permute.xlu0 %115
    %vm117 = vcmp.eq.s32.totalorder %v92, %v95
    %vm118 = vcmp.eq.s32.totalorder %v92, %v98
    %vm119 = vcmp.eq.s32.totalorder %v92, %v101
    %vm120 = vcmp.eq.s32.totalorder %v92, %v104
    %vm121 = vcmp.eq.s32.totalorder %v92, %v107
    %vm122 = vcmp.eq.s32.totalorder %v92, %v110
    %vm123 = vcmp.eq.s32.totalorder %v92, %v113
    %vm124 = vcmp.eq.s32.totalorder %v92, %v116
    %v125 = vsel %vm117, 1.0, 0.0
    %v126 = vsel %vm118, 1.0, 0.0
    %v127 = vsel %vm119, 1.0, 0.0
    %v128 = vsel %vm120, 1.0, 0.0
    %v129 = vsel %vm121, 1.0, 0.0
    %v130 = vsel %vm122, 1.0, 0.0
    %v131 = vsel %vm123, 1.0, 0.0
    %v132 = vsel %vm124, 1.0, 0.0
    %v133 = vpack.c.bf16 %v126, %v125
    %v134 = vpack.c.bf16 %v128, %v127
    %v135 = vpack.c.bf16 %v130, %v129
    %v136 = vpack.c.bf16 %v132, %v131
    %v137 = vld [vmem:[%s1] sm:$0xf]
    %v138 = vld [vmem:[%s1 + $0x4] sm:$0xf]
    %v139 = vld [vmem:[%s1 + $0x8] sm:$0xf]
    %v140 = vld [vmem:[%s1 + $0xc] sm:$0xf]
    %v141 = vld [vmem:[%s1 + $0x10] sm:$0xf]
    %v142 = vld [vmem:[%s1 + $0x14] sm:$0xf]
    %v143 = vld [vmem:[%s1 + $0x18] sm:$0xf]
    %v144 = vld [vmem:[%s1 + $0x1c] sm:$0xf]
    %v145 = vld [vmem:[%s1 + $0x20] sm:$0xf]
    %v146 = vld [vmem:[%s1 + $0x24] sm:$0xf]
    %v147 = vld [vmem:[%s1 + $0x28] sm:$0xf]
    %v148 = vld [vmem:[%s1 + $0x2c] sm:$0xf]
    %v149 = vld [vmem:[%s1 + $0x30] sm:$0xf]
    %v150 = vld [vmem:[%s1 + $0x34] sm:$0xf]
    %v151 = vld [vmem:[%s1 + $0x38] sm:$0xf]
    %v152 = vld [vmem:[%s1 + $0x3c] sm:$0xf]
    %v169 = vunpack.c.l.b16 %v137
    %v170 = vunpack.c.l.b16 %v138
    %v171 = vunpack.c.l.b16 %v139
    %v172 = vunpack.c.l.b16 %v140
    %v173 = vunpack.c.l.b16 %v141
    %v174 = vunpack.c.l.b16 %v142
    %v175 = vunpack.c.l.b16 %v143
    %v176 = vunpack.c.l.b16 %v144
    %v177 = vunpack.c.l.b16 %v145
    %v178 = vunpack.c.l.b16 %v146
    %v179 = vunpack.c.l.b16 %v147
    %v180 = vunpack.c.l.b16 %v148
    %v181 = vunpack.c.l.b16 %v149
    %v182 = vunpack.c.l.b16 %v150
    %v183 = vunpack.c.l.b16 %v151
    %v184 = vunpack.c.l.b16 %v152
    %v185 = vpack.c.b16 %v170, %v169
    %v186 = vpack.c.b16 %v172, %v171
    %v187 = vpack.c.b16 %v174, %v173
    %v188 = vpack.c.b16 %v176, %v175
    %v189 = vpack.c.b16 %v178, %v177
    %v190 = vpack.c.b16 %v180, %v179
    %v191 = vpack.c.b16 %v182, %v181
    %v192 = vpack.c.b16 %v184, %v183
    %201 = vmatprep.subr.bf16.mxu0 0
    %202 = vmatpush1.bf16.msra.mxu0 %v192
    %203 = vmatprep.subr.bf16.mxu0 0
    %204 = vmatpush1.bf16.msra.mxu0 %v191
    %205 = vmatprep.subr.bf16.mxu0 0
    %206 = vmatpush1.bf16.msra.mxu0 %v190
    %207 = vmatprep.subr.bf16.mxu0 0
    %208 = vmatpush1.bf16.msra.mxu0 %v189
    %209 = vmatprep.subr.bf16.mxu0 0
    %210 = vmatpush1.bf16.msra.mxu0 %v188
    %211 = vmatprep.subr.bf16.mxu0 0
    %212 = vmatpush1.bf16.msra.mxu0 %v187
    %213 = vmatprep.subr.bf16.mxu0 0
    %214 = vmatpush1.bf16.msra.mxu0 %v186
    %215 = vmatprep.subr.bf16.mxu0 0
    %216 = vmatpush1.bf16.msra.mxu0 %v185
    %217 = vmatprep.subr.bf16.mxu0 0
    %218 = vmatpush2.bf16.msra.mxu0 0
    %219 = vmatprep.subr.bf16.mxu0 0
    %220 = vmatpush2.bf16.msra.mxu0 0
    %221 = vmatprep.subr.bf16.mxu0 0
    %222 = vmatpush2.bf16.msra.mxu0 0
    %223 = vmatprep.subr.bf16.mxu0 0
    %224 = vmatpush2.bf16.msra.mxu0 0
    %225 = vmatprep.subr.bf16.mxu0 0
    %226 = vmatpush2.bf16.msra.mxu0 0
    %227 = vmatprep.subr.bf16.mxu0 0
    %228 = vmatpush2.bf16.msra.mxu0 0
    %229 = vmatprep.subr.bf16.mxu0 0
    %230 = vmatpush2.bf16.msra.mxu0 0
    %231 = vmatprep.subr.bf16.mxu0 0
    %232 = vmatpush2.bf16.msra.mxu0 0
    %233 = vmatprep.mubr.bf16.mxu0 0
    %234 = vmatmul.mubr.bf16.gmra.mxu0 %v133
    %v235 = vpop.f32.mrf.mxu0
    %v236 = vadd.f32 0.0, %v235
    %v237 = vpop.f32.mrf.mxu0
    %v238 = vpop.f32.mrf.mxu0
    %v239 = vadd.f32 0.0, %v238
    %v240 = vpop.f32.mrf.mxu0
    %241 = vmatprep.mubr.bf16.mxu0 0
    %242 = vmatmul.mubr.bf16.gmra.mxu0 %v134
    %v243 = vpop.f32.mrf.mxu0
    %v244 = vadd.f32 0.0, %v243
    %v245 = vpop.f32.mrf.mxu0
    %v246 = vpop.f32.mrf.mxu0
    %v247 = vadd.f32 0.0, %v246
    %v248 = vpop.f32.mrf.mxu0
    %249 = vmatprep.mubr.bf16.mxu0 0
    %250 = vmatmul.mubr.bf16.gmra.mxu0 %v135
    %v251 = vpop.f32.mrf.mxu0
    %v252 = vadd.f32 0.0, %v251
    %v253 = vpop.f32.mrf.mxu0
    %v254 = vpop.f32.mrf.mxu0
    %v255 = vadd.f32 0.0, %v254
    %v256 = vpop.f32.mrf.mxu0
    %257 = vmatprep.mubr.bf16.mxu0 0
    %258 = vmatmul.mubr.bf16.gmra.mxu0 %v136
    %v259 = vpop.f32.mrf.mxu0
    %v260 = vadd.f32 0.0, %v259
    %v261 = vpop.f32.mrf.mxu0
    %v262 = vpop.f32.mrf.mxu0
    %v263 = vadd.f32 0.0, %v262
    %v264 = vpop.f32.mrf.mxu0
    %265 = vdwg.mxu0
    %v266 = vld [vmem:[#allocation3] sm:$0xf]
    %v267 = vld [vmem:[#allocation3 + $0x4] sm:$0xf]
    %v268 = vld [vmem:[#allocation3 + $0x8] sm:$0xf]
    %v269 = vld [vmem:[#allocation3 + $0xc] sm:$0xf]
    %v270 = vld [vmem:[%s5] sm:$0xff]
    %v271 = vld [vmem:[#allocation9] sm:$0xff]
    %v272 = vpack.c.bf16 %v270, %v270
    %v277 = vunpack.c.l.b16 %v266
    %v278 = vunpack.c.l.b16 %v267
    %v279 = vunpack.c.l.b16 %v268
    %v280 = vunpack.c.l.b16 %v269
    %v281 = vpack.c.b16 %v278, %v277
    %v282 = vpack.c.b16 %v280, %v279
    %vm285 = vcmask 261120
    %v287 = vsel %vm285, %v272, 0
    %289 = vmatprep.subr.bf16.mxu0 0
    %290 = vmatpush1.bf16.msra.mxu0 0
    %291 = vmatprep.subr.bf16.mxu0 0
    %292 = vmatpush1.bf16.msra.mxu0 0
    %293 = vmatprep.subr.bf16.mxu0 0
    %294 = vmatpush1.bf16.msra.mxu0 0
    %295 = vmatprep.subr.bf16.mxu0 0
    %296 = vmatpush1.bf16.msra.mxu0 0
    %297 = vmatprep.subr.bf16.mxu0 0
    %298 = vmatpush1.bf16.msra.mxu0 0
    %299 = vmatprep.subr.bf16.mxu0 0
    %300 = vmatpush1.bf16.msra.mxu0 0
    %301 = vmatprep.subr.bf16.mxu0 0
    %302 = vmatpush1.bf16.msra.mxu0 %v282
    %303 = vmatprep.subr.bf16.mxu0 0
    %304 = vmatpush1.bf16.msra.mxu0 %v281
    %305 = vmatprep.subr.bf16.mxu0 0
    %306 = vmatpush2.bf16.msra.mxu0 0
    %307 = vmatprep.subr.bf16.mxu0 0
    %308 = vmatpush2.bf16.msra.mxu0 0
    %309 = vmatprep.subr.bf16.mxu0 0
    %310 = vmatpush2.bf16.msra.mxu0 0
    %311 = vmatprep.subr.bf16.mxu0 0
    %312 = vmatpush2.bf16.msra.mxu0 0
    %313 = vmatprep.subr.bf16.mxu0 0
    %314 = vmatpush2.bf16.msra.mxu0 0
    %315 = vmatprep.subr.bf16.mxu0 0
    %316 = vmatpush2.bf16.msra.mxu0 0
    %317 = vmatprep.subr.bf16.mxu0 0
    %318 = vmatpush2.bf16.msra.mxu0 0
    %319 = vmatprep.subr.bf16.mxu0 0
    %320 = vmatpush2.bf16.msra.mxu0 0
    %321 = vmatprep.mubr.bf16.mxu0 0
    %322 = vmatmul.mubr.bf16.gmra.mxu0 %v287
    %v323 = vpop.f32.mrf.mxu0
    %v324 = vadd.f32 0.0, %v323
    %v325 = vpop.f32.mrf.mxu0
    %v326 = vpop.f32.mrf.mxu0
    %v327 = vpop.f32.mrf.mxu0
    %328 = vdwg.mxu0
    %v329 = vadd.f32 %v236, %v324
    %v330 = vxor.u32 %v329, 2147483648
    %v331 = vmul.f32 %v330, 1.442695
    %v332 = vpow.pop %v331
    %v333 = vadd.f32 %v332, 1.0
    %v334 = vrcp.pop %v333
    %v335 = vmul.f32 1.0, %v334
    %v336 = vtanh.pop %v329
    %338 = vrot.lane.b32.xlu0 %v271, 32
    %v339 = vpop.permute.xlu0 %338
    %v341 = vmul.f32 %v335, %v339
    %343 = vrot.lane.b32.xlu0 %v336, 64
    %v344 = vpop.permute.xlu0 %343
    %v346 = vmul.f32 %v335, %v344
    %348 = vrot.lane.b32.xlu0 %v346, 32
    %v349 = vpop.permute.xlu0 %348
    %v351 = vadd.f32 %v341, %v349
    %v352 = vtanh.pop %v351
    %354 = vrot.lane.b32.xlu0 %v352, 64
    %v355 = vpop.permute.xlu0 %354
    %v357 = vmul.f32 %v335, %v355
    %359 = vrot.lane.b32.xlu0 %v357, 32
    %v360 = vpop.permute.xlu0 %359
    %362 = vst.msk [vmem:[#allocation2] sm:$0xff] %vm285, %v360
    %v363 = vpack.c.bf16 %v357, %v357
    %365 = vrot.lane.b32.xlu0 %v363, 32
    %v366 = vpop.permute.xlu0 %365
    %v368 = vsel %vm285, %v366, 0
    %370 = vmatprep.subr.bf16.mxu0 0
    %371 = vmatpush1.bf16.msra.mxu0 0
    %372 = vmatprep.subr.bf16.mxu0 0
    %373 = vmatpush1.bf16.msra.mxu0 0
    %374 = vmatprep.subr.bf16.mxu0 0
    %375 = vmatpush1.bf16.msra.mxu0 0
    %376 = vmatprep.subr.bf16.mxu0 0
    %377 = vmatpush1.bf16.msra.mxu0 0
    %378 = vmatprep.subr.bf16.mxu0 0
    %379 = vmatpush1.bf16.msra.mxu0 0
    %380 = vmatprep.subr.bf16.mxu0 0
    %381 = vmatpush1.bf16.msra.mxu0 0
    %382 = vmatprep.subr.bf16.mxu0 0
    %383 = vmatpush1.bf16.msra.mxu0 %v282
    %384 = vmatprep.subr.bf16.mxu0 0
    %385 = vmatpush1.bf16.msra.mxu0 %v281
    %386 = vmatprep.subr.bf16.mxu0 0
    %387 = vmatpush2.bf16.msra.mxu0 0
    %388 = vmatprep.subr.bf16.mxu0 0
    %389 = vmatpush2.bf16.msra.mxu0 0
    %390 = vmatprep.subr.bf16.mxu0 0
    %391 = vmatpush2.bf16.msra.mxu0 0
    %392 = vmatprep.subr.bf16.mxu0 0
    %393 = vmatpush2.bf16.msra.mxu0 0
    %394 = vmatprep.subr.bf16.mxu0 0
    %395 = vmatpush2.bf16.msra.mxu0 0
    %396 = vmatprep.subr.bf16.mxu0 0
    %397 = vmatpush2.bf16.msra.mxu0 0
    %398 = vmatprep.subr.bf16.mxu0 0
    %399 = vmatpush2.bf16.msra.mxu0 0
    %400 = vmatprep.subr.bf16.mxu0 0
    %401 = vmatpush2.bf16.msra.mxu0 0
    %402 = vmatprep.mubr.bf16.mxu0 0
    %403 = vmatmul.mubr.bf16.gmra.mxu0 %v368
    %v404 = vpop.f32.mrf.mxu0
    %v405 = vadd.f32 0.0, %v404
    %v406 = vpop.f32.mrf.mxu0
    %v407 = vpop.f32.mrf.mxu0
    %v408 = vpop.f32.mrf.mxu0
    %409 = vdwg.mxu0
    %v410 = vadd.f32 %v239, %v405
    %v411 = vxor.u32 %v410, 2147483648
    %v412 = vmul.f32 %v411, 1.442695
    %v413 = vpow.pop %v412
    %v414 = vadd.f32 %v413, 1.0
    %v415 = vrcp.pop %v414
    %v416 = vmul.f32 1.0, %v415
    %v417 = vtanh.pop %v410
    %v418 = vmul.f32 %v416, %v351
    %420 = vrot.lane.b32.xlu0 %v417, 64
    %v421 = vpop.permute.xlu0 %420
    %v423 = vmul.f32 %v416, %v421
    %425 = vrot.lane.b32.xlu0 %v423, 32
    %v426 = vpop.permute.xlu0 %425
    %v428 = vadd.f32 %v418, %v426
    %v429 = vtanh.pop %v428
    %431 = vrot.lane.b32.xlu0 %v429, 64
    %v432 = vpop.permute.xlu0 %431
    %v434 = vmul.f32 %v416, %v432
    %436 = vrot.lane.b32.xlu0 %v434, 32
    %v437 = vpop.permute.xlu0 %436
    %439 = vst.msk [vmem:[#allocation2 + $0x8] sm:$0xff] %vm285, %v437
    %v440 = vpack.c.bf16 %v434, %v434
    %442 = vrot.lane.b32.xlu0 %v440, 32
    %v443 = vpop.permute.xlu0 %442
    %v445 = vsel %vm285, %v443, 0
    %447 = vmatprep.subr.bf16.mxu0 0
    %448 = vmatpush1.bf16.msra.mxu0 0
    %449 = vmatprep.subr.bf16.mxu0 0
    %450 = vmatpush1.bf16.msra.mxu0 0
    %451 = vmatprep.subr.bf16.mxu0 0
    %452 = vmatpush1.bf16.msra.mxu0 0
    %453 = vmatprep.subr.bf16.mxu0 0
    %454 = vmatpush1.bf16.msra.mxu0 0
    %455 = vmatprep.subr.bf16.mxu0 0
    %456 = vmatpush1.bf16.msra.mxu0 0
    %457 = vmatprep.subr.bf16.mxu0 0
    %458 = vmatpush1.bf16.msra.mxu0 0
    %459 = vmatprep.subr.bf16.mxu0 0
    %460 = vmatpush1.bf16.msra.mxu0 %v282
    %461 = vmatprep.subr.bf16.mxu0 0
    %462 = vmatpush1.bf16.msra.mxu0 %v281
    %463 = vmatprep.subr.bf16.mxu0 0
    %464 = vmatpush2.bf16.msra.mxu0 0
    %465 = vmatprep.subr.bf16.mxu0 0
    %466 = vmatpush2.bf16.msra.mxu0 0
    %467 = vmatprep.subr.bf16.mxu0 0
    %468 = vmatpush2.bf16.msra.mxu0 0
    %469 = vmatprep.subr.bf16.mxu0 0
    %470 = vmatpush2.bf16.msra.mxu0 0
    %471 = vmatprep.subr.bf16.mxu0 0
    %472 = vmatpush2.bf16.msra.mxu0 0
    %473 = vmatprep.subr.bf16.mxu0 0
    %474 = vmatpush2.bf16.msra.mxu0 0
    %475 = vmatprep.subr.bf16.mxu0 0
    %476 = vmatpush2.bf16.msra.mxu0 0
    %477 = vmatprep.subr.bf16.mxu0 0
    %478 = vmatpush2.bf16.msra.mxu0 0
    %479 = vmatprep.mubr.bf16.mxu0 0
    %480 = vmatmul.mubr.bf16.gmra.mxu0 %v445
    %v481 = vpop.f32.mrf.mxu0
    %v482 = vadd.f32 0.0, %v481
    %v483 = vpop.f32.mrf.mxu0
    %v484 = vpop.f32.mrf.mxu0
    %v485 = vpop.f32.mrf.mxu0
    %486 = vdwg.mxu0
    %v487 = vadd.f32 %v244, %v482
    %v488 = vxor.u32 %v487, 2147483648
    %v489 = vmul.f32 %v488, 1.442695
    %v490 = vpow.pop %v489
    %v491 = vadd.f32 %v490, 1.0
    %v492 = vrcp.pop %v491
    %v493 = vmul.f32 1.0, %v492
    %v494 = vtanh.pop %v487
    %v495 = vmul.f32 %v493, %v428
    %497 = vrot.lane.b32.xlu0 %v494, 64
    %v498 = vpop.permute.xlu0 %497
    %v500 = vmul.f32 %v493, %v498
    %502 = vrot.lane.b32.xlu0 %v500, 32
    %v503 = vpop.permute.xlu0 %502
    %v505 = vadd.f32 %v495, %v503
    %v506 = vtanh.pop %v505
    %508 = vrot.lane.b32.xlu0 %v506, 64
    %v509 = vpop.permute.xlu0 %508
    %v511 = vmul.f32 %v493, %v509
    %513 = vrot.lane.b32.xlu0 %v511, 32
    %v514 = vpop.permute.xlu0 %513
    %516 = vst.msk [vmem:[#allocation2 + $0x10] sm:$0xff] %vm285, %v514
    %v517 = vpack.c.bf16 %v511, %v511
    %519 = vrot.lane.b32.xlu0 %v517, 32
    %v520 = vpop.permute.xlu0 %519
    %v522 = vsel %vm285, %v520, 0
    %524 = vmatprep.subr.bf16.mxu0 0
    %525 = vmatpush1.bf16.msra.mxu0 0
    %526 = vmatprep.subr.bf16.mxu0 0
    %527 = vmatpush1.bf16.msra.mxu0 0
    %528 = vmatprep.subr.bf16.mxu0 0
    %529 = vmatpush1.bf16.msra.mxu0 0
    %530 = vmatprep.subr.bf16.mxu0 0
    %531 = vmatpush1.bf16.msra.mxu0 0
    %532 = vmatprep.subr.bf16.mxu0 0
    %533 = vmatpush1.bf16.msra.mxu0 0
    %534 = vmatprep.subr.bf16.mxu0 0
    %535 = vmatpush1.bf16.msra.mxu0 0
    %536 = vmatprep.subr.bf16.mxu0 0
    %537 = vmatpush1.bf16.msra.mxu0 %v282
    %538 = vmatprep.subr.bf16.mxu0 0
    %539 = vmatpush1.bf16.msra.mxu0 %v281
    %540 = vmatprep.subr.bf16.mxu0 0
    %541 = vmatpush2.bf16.msra.mxu0 0
    %542 = vmatprep.subr.bf16.mxu0 0
    %543 = vmatpush2.bf16.msra.mxu0 0
    %544 = vmatprep.subr.bf16.mxu0 0
    %545 = vmatpush2.bf16.msra.mxu0 0
    %546 = vmatprep.subr.bf16.mxu0 0
    %547 = vmatpush2.bf16.msra.mxu0 0
    %548 = vmatprep.subr.bf16.mxu0 0
    %549 = vmatpush2.bf16.msra.mxu0 0
    %550 = vmatprep.subr.bf16.mxu0 0
    %551 = vmatpush2.bf16.msra.mxu0 0
    %552 = vmatprep.subr.bf16.mxu0 0
    %553 = vmatpush2.bf16.msra.mxu0 0
    %554 = vmatprep.subr.bf16.mxu0 0
    %555 = vmatpush2.bf16.msra.mxu0 0
    %556 = vmatprep.mubr.bf16.mxu0 0
    %557 = vmatmul.mubr.bf16.gmra.mxu0 %v522
    %v558 = vpop.f32.mrf.mxu0
    %v559 = vadd.f32 0.0, %v558
    %v560 = vpop.f32.mrf.mxu0
    %v561 = vpop.f32.mrf.mxu0
    %v562 = vpop.f32.mrf.mxu0
    %563 = vdwg.mxu0
    %v564 = vadd.f32 %v247, %v559
    %v565 = vxor.u32 %v564, 2147483648
    %v566 = vmul.f32 %v565, 1.442695
    %v567 = vpow.pop %v566
    %v568 = vadd.f32 %v567, 1.0
    %v569 = vrcp.pop %v568
    %v570 = vmul.f32 1.0, %v569
    %v571 = vtanh.pop %v564
    %v572 = vmul.f32 %v570, %v505
    %574 = vrot.lane.b32.xlu0 %v571, 64
    %v575 = vpop.permute.xlu0 %574
    %v577 = vmul.f32 %v570, %v575
    %579 = vrot.lane.b32.xlu0 %v577, 32
    %v580 = vpop.permute.xlu0 %579
    %v582 = vadd.f32 %v572, %v580
    %v583 = vtanh.pop %v582
    %585 = vrot.lane.b32.xlu0 %v583, 64
    %v586 = vpop.permute.xlu0 %585
    %v588 = vmul.f32 %v570, %v586
    %590 = vrot.lane.b32.xlu0 %v588, 32
    %v591 = vpop.permute.xlu0 %590
    %593 = vst.msk [vmem:[#allocation2 + $0x18] sm:$0xff] %vm285, %v591
    %v594 = vpack.c.bf16 %v588, %v588
    %596 = vrot.lane.b32.xlu0 %v594, 32
    %v597 = vpop.permute.xlu0 %596
    %v599 = vsel %vm285, %v597, 0
    %601 = vmatprep.subr.bf16.mxu0 0
    %602 = vmatpush1.bf16.msra.mxu0 0
    %603 = vmatprep.subr.bf16.mxu0 0
    %604 = vmatpush1.bf16.msra.mxu0 0
    %605 = vmatprep.subr.bf16.mxu0 0
    %606 = vmatpush1.bf16.msra.mxu0 0
    %607 = vmatprep.subr.bf16.mxu0 0
    %608 = vmatpush1.bf16.msra.mxu0 0
    %609 = vmatprep.subr.bf16.mxu0 0
    %610 = vmatpush1.bf16.msra.mxu0 0
    %611 = vmatprep.subr.bf16.mxu0 0
    %612 = vmatpush1.bf16.msra.mxu0 0
    %613 = vmatprep.subr.bf16.mxu0 0
    %614 = vmatpush1.bf16.msra.mxu0 %v282
    %615 = vmatprep.subr.bf16.mxu0 0
    %616 = vmatpush1.bf16.msra.mxu0 %v281
    %617 = vmatprep.subr.bf16.mxu0 0
    %618 = vmatpush2.bf16.msra.mxu0 0
    %619 = vmatprep.subr.bf16.mxu0 0
    %620 = vmatpush2.bf16.msra.mxu0 0
    %621 = vmatprep.subr.bf16.mxu0 0
    %622 = vmatpush2.bf16.msra.mxu0 0
    %623 = vmatprep.subr.bf16.mxu0 0
    %624 = vmatpush2.bf16.msra.mxu0 0
    %625 = vmatprep.subr.bf16.mxu0 0
    %626 = vmatpush2.bf16.msra.mxu0 0
    %627 = vmatprep.subr.bf16.mxu0 0
    %628 = vmatpush2.bf16.msra.mxu0 0
    %629 = vmatprep.subr.bf16.mxu0 0
    %630 = vmatpush2.bf16.msra.mxu0 0
    %631 = vmatprep.subr.bf16.mxu0 0
    %632 = vmatpush2.bf16.msra.mxu0 0
    %633 = vmatprep.mubr.bf16.mxu0 0
    %634 = vmatmul.mubr.bf16.gmra.mxu0 %v599
    %v635 = vpop.f32.mrf.mxu0
    %v636 = vadd.f32 0.0, %v635
    %v637 = vpop.f32.mrf.mxu0
    %v638 = vpop.f32.mrf.mxu0
    %v639 = vpop.f32.mrf.mxu0
    %640 = vdwg.mxu0
    %v641 = vadd.f32 %v252, %v636
    %v642 = vxor.u32 %v641, 2147483648
    %v643 = vmul.f32 %v642, 1.442695
    %v644 = vpow.pop %v643
    %v645 = vadd.f32 %v644, 1.0
    %v646 = vrcp.pop %v645
    %v647 = vmul.f32 1.0, %v646
    %v648 = vtanh.pop %v641
    %v649 = vmul.f32 %v647, %v582
    %651 = vrot.lane.b32.xlu0 %v648, 64
    %v652 = vpop.permute.xlu0 %651
    %v654 = vmul.f32 %v647, %v652
    %656 = vrot.lane.b32.xlu0 %v654, 32
    %v657 = vpop.permute.xlu0 %656
    %v659 = vadd.f32 %v649, %v657
    %v660 = vtanh.pop %v659
    %662 = vrot.lane.b32.xlu0 %v660, 64
    %v663 = vpop.permute.xlu0 %662
    %v665 = vmul.f32 %v647, %v663
    %667 = vrot.lane.b32.xlu0 %v665, 32
    %v668 = vpop.permute.xlu0 %667
    %670 = vst.msk [vmem:[#allocation2 + $0x20] sm:$0xff] %vm285, %v668
    %v671 = vpack.c.bf16 %v665, %v665
    %673 = vrot.lane.b32.xlu0 %v671, 32
    %v674 = vpop.permute.xlu0 %673
    %v676 = vsel %vm285, %v674, 0
    %678 = vmatprep.subr.bf16.mxu0 0
    %679 = vmatpush1.bf16.msra.mxu0 0
    %680 = vmatprep.subr.bf16.mxu0 0
    %681 = vmatpush1.bf16.msra.mxu0 0
    %682 = vmatprep.subr.bf16.mxu0 0
    %683 = vmatpush1.bf16.msra.mxu0 0
    %684 = vmatprep.subr.bf16.mxu0 0
    %685 = vmatpush1.bf16.msra.mxu0 0
    %686 = vmatprep.subr.bf16.mxu0 0
    %687 = vmatpush1.bf16.msra.mxu0 0
    %688 = vmatprep.subr.bf16.mxu0 0
    %689 = vmatpush1.bf16.msra.mxu0 0
    %690 = vmatprep.subr.bf16.mxu0 0
    %691 = vmatpush1.bf16.msra.mxu0 %v282
    %692 = vmatprep.subr.bf16.mxu0 0
    %693 = vmatpush1.bf16.msra.mxu0 %v281
    %694 = vmatprep.subr.bf16.mxu0 0
    %695 = vmatpush2.bf16.msra.mxu0 0
    %696 = vmatprep.subr.bf16.mxu0 0
    %697 = vmatpush2.bf16.msra.mxu0 0
    %698 = vmatprep.subr.bf16.mxu0 0
    %699 = vmatpush2.bf16.msra.mxu0 0
    %700 = vmatprep.subr.bf16.mxu0 0
    %701 = vmatpush2.bf16.msra.mxu0 0
    %702 = vmatprep.subr.bf16.mxu0 0
    %703 = vmatpush2.bf16.msra.mxu0 0
    %704 = vmatprep.subr.bf16.mxu0 0
    %705 = vmatpush2.bf16.msra.mxu0 0
    %706 = vmatprep.subr.bf16.mxu0 0
    %707 = vmatpush2.bf16.msra.mxu0 0
    %708 = vmatprep.subr.bf16.mxu0 0
    %709 = vmatpush2.bf16.msra.mxu0 0
    %710 = vmatprep.mubr.bf16.mxu0 0
    %711 = vmatmul.mubr.bf16.gmra.mxu0 %v676
    %v712 = vpop.f32.mrf.mxu0
    %v713 = vadd.f32 0.0, %v712
    %v714 = vpop.f32.mrf.mxu0
    %v715 = vpop.f32.mrf.mxu0
    %v716 = vpop.f32.mrf.mxu0
    %717 = vdwg.mxu0
    %v718 = vadd.f32 %v255, %v713
    %v719 = vxor.u32 %v718, 2147483648
    %v720 = vmul.f32 %v719, 1.442695
    %v721 = vpow.pop %v720
    %v722 = vadd.f32 %v721, 1.0
    %v723 = vrcp.pop %v722
    %v724 = vmul.f32 1.0, %v723
    %v725 = vtanh.pop %v718
    %v726 = vmul.f32 %v724, %v659
    %728 = vrot.lane.b32.xlu0 %v725, 64
    %v729 = vpop.permute.xlu0 %728
    %v731 = vmul.f32 %v724, %v729
    %733 = vrot.lane.b32.xlu0 %v731, 32
    %v734 = vpop.permute.xlu0 %733
    %v736 = vadd.f32 %v726, %v734
    %v737 = vtanh.pop %v736
    %739 = vrot.lane.b32.xlu0 %v737, 64
    %v740 = vpop.permute.xlu0 %739
    %v742 = vmul.f32 %v724, %v740
    %744 = vrot.lane.b32.xlu0 %v742, 32
    %v745 = vpop.permute.xlu0 %744
    %747 = vst.msk [vmem:[#allocation2 + $0x28] sm:$0xff] %vm285, %v745
    %v748 = vpack.c.bf16 %v742, %v742
    %750 = vrot.lane.b32.xlu0 %v748, 32
    %v751 = vpop.permute.xlu0 %750
    %v753 = vsel %vm285, %v751, 0
    %755 = vmatprep.subr.bf16.mxu0 0
    %756 = vmatpush1.bf16.msra.mxu0 0
    %757 = vmatprep.subr.bf16.mxu0 0
    %758 = vmatpush1.bf16.msra.mxu0 0
    %759 = vmatprep.subr.bf16.mxu0 0
    %760 = vmatpush1.bf16.msra.mxu0 0
    %761 = vmatprep.subr.bf16.mxu0 0
    %762 = vmatpush1.bf16.msra.mxu0 0
    %763 = vmatprep.subr.bf16.mxu0 0
    %764 = vmatpush1.bf16.msra.mxu0 0
    %765 = vmatprep.subr.bf16.mxu0 0
    %766 = vmatpush1.bf16.msra.mxu0 0
    %767 = vmatprep.subr.bf16.mxu0 0
    %768 = vmatpush1.bf16.msra.mxu0 %v282
    %769 = vmatprep.subr.bf16.mxu0 0
    %770 = vmatpush1.bf16.msra.mxu0 %v281
    %771 = vmatprep.subr.bf16.mxu0 0
    %772 = vmatpush2.bf16.msra.mxu0 0
    %773 = vmatprep.subr.bf16.mxu0 0
    %774 = vmatpush2.bf16.msra.mxu0 0
    %775 = vmatprep.subr.bf16.mxu0 0
    %776 = vmatpush2.bf16.msra.mxu0 0
    %777 = vmatprep.subr.bf16.mxu0 0
    %778 = vmatpush2.bf16.msra.mxu0 0
    %779 = vmatprep.subr.bf16.mxu0 0
    %780 = vmatpush2.bf16.msra.mxu0 0
    %781 = vmatprep.subr.bf16.mxu0 0
    %782 = vmatpush2.bf16.msra.mxu0 0
    %783 = vmatprep.subr.bf16.mxu0 0
    %784 = vmatpush2.bf16.msra.mxu0 0
    %785 = vmatprep.subr.bf16.mxu0 0
    %786 = vmatpush2.bf16.msra.mxu0 0
    %787 = vmatprep.mubr.bf16.mxu0 0
    %788 = vmatmul.mubr.bf16.gmra.mxu0 %v753
    %v789 = vpop.f32.mrf.mxu0
    %v790 = vadd.f32 0.0, %v789
    %v791 = vpop.f32.mrf.mxu0
    %v792 = vpop.f32.mrf.mxu0
    %v793 = vpop.f32.mrf.mxu0
    %794 = vdwg.mxu0
    %v795 = vadd.f32 %v260, %v790
    %v796 = vxor.u32 %v795, 2147483648
    %v797 = vmul.f32 %v796, 1.442695
    %v798 = vpow.pop %v797
    %v799 = vadd.f32 %v798, 1.0
    %v800 = vrcp.pop %v799
    %v801 = vmul.f32 1.0, %v800
    %v802 = vtanh.pop %v795
    %v803 = vmul.f32 %v801, %v736
    %805 = vrot.lane.b32.xlu0 %v802, 64
    %v806 = vpop.permute.xlu0 %805
    %v808 = vmul.f32 %v801, %v806
    %810 = vrot.lane.b32.xlu0 %v808, 32
    %v811 = vpop.permute.xlu0 %810
    %v813 = vadd.f32 %v803, %v811
    %v814 = vtanh.pop %v813
    %816 = vrot.lane.b32.xlu0 %v814, 64
    %v817 = vpop.permute.xlu0 %816
    %v819 = vmul.f32 %v801, %v817
    %821 = vrot.lane.b32.xlu0 %v819, 32
    %v822 = vpop.permute.xlu0 %821
    %824 = vst.msk [vmem:[#allocation2 + $0x30] sm:$0xff] %vm285, %v822
    %v825 = vpack.c.bf16 %v819, %v819
    %827 = vrot.lane.b32.xlu0 %v825, 32
    %v828 = vpop.permute.xlu0 %827
    %v830 = vsel %vm285, %v828, 0
    %832 = vmatprep.subr.bf16.mxu0 0
    %833 = vmatpush1.bf16.msra.mxu0 0
    %834 = vmatprep.subr.bf16.mxu0 0
    %835 = vmatpush1.bf16.msra.mxu0 0
    %836 = vmatprep.subr.bf16.mxu0 0
    %837 = vmatpush1.bf16.msra.mxu0 0
    %838 = vmatprep.subr.bf16.mxu0 0
    %839 = vmatpush1.bf16.msra.mxu0 0
    %840 = vmatprep.subr.bf16.mxu0 0
    %841 = vmatpush1.bf16.msra.mxu0 0
    %842 = vmatprep.subr.bf16.mxu0 0
    %843 = vmatpush1.bf16.msra.mxu0 0
    %844 = vmatprep.subr.bf16.mxu0 0
    %845 = vmatpush1.bf16.msra.mxu0 %v282
    %846 = vmatprep.subr.bf16.mxu0 0
    %847 = vmatpush1.bf16.msra.mxu0 %v281
    %848 = vmatprep.subr.bf16.mxu0 0
    %849 = vmatpush2.bf16.msra.mxu0 0
    %850 = vmatprep.subr.bf16.mxu0 0
    %851 = vmatpush2.bf16.msra.mxu0 0
    %852 = vmatprep.subr.bf16.mxu0 0
    %853 = vmatpush2.bf16.msra.mxu0 0
    %854 = vmatprep.subr.bf16.mxu0 0
    %855 = vmatpush2.bf16.msra.mxu0 0
    %856 = vmatprep.subr.bf16.mxu0 0
    %857 = vmatpush2.bf16.msra.mxu0 0
    %858 = vmatprep.subr.bf16.mxu0 0
    %859 = vmatpush2.bf16.msra.mxu0 0
    %860 = vmatprep.subr.bf16.mxu0 0
    %861 = vmatpush2.bf16.msra.mxu0 0
    %862 = vmatprep.subr.bf16.mxu0 0
    %863 = vmatpush2.bf16.msra.mxu0 0
    %864 = vmatprep.mubr.bf16.mxu0 0
    %865 = vmatmul.mubr.bf16.gmra.mxu0 %v830
    %v866 = vpop.f32.mrf.mxu0
    %v867 = vadd.f32 0.0, %v866
    %v868 = vpop.f32.mrf.mxu0
    %v869 = vpop.f32.mrf.mxu0
    %v870 = vpop.f32.mrf.mxu0
    %871 = vdwg.mxu0
    %v872 = vadd.f32 %v263, %v867
    %v873 = vxor.u32 %v872, 2147483648
    %v874 = vmul.f32 %v873, 1.442695
    %v875 = vpow.pop %v874
    %v876 = vadd.f32 %v875, 1.0
    %v877 = vrcp.pop %v876
    %v878 = vmul.f32 1.0, %v877
    %v879 = vtanh.pop %v872
    %v880 = vmul.f32 %v878, %v813
    %882 = vrot.lane.b32.xlu0 %v879, 64
    %v883 = vpop.permute.xlu0 %882
    %v885 = vmul.f32 %v878, %v883
    %887 = vrot.lane.b32.xlu0 %v885, 32
    %v888 = vpop.permute.xlu0 %887
    %v890 = vadd.f32 %v880, %v888
    %v891 = vtanh.pop %v890
    %893 = vrot.lane.b32.xlu0 %v891, 64
    %v894 = vpop.permute.xlu0 %893
    %v896 = vmul.f32 %v878, %v894
    %898 = vrot.lane.b32.xlu0 %v896, 32
    %v899 = vpop.permute.xlu0 %898
    %901 = vst.msk [vmem:[#allocation2 + $0x38] sm:$0xff] %vm285, %v899
    %902 = vst.msk [vmem:[#allocation12] sm:$0xff] %vm285, %v899
    %904 = vrot.lane.b32.xlu0 %v890, 96
    %v905 = vpop.permute.xlu0 %904
    %907 = vst.msk [vmem:[#allocation14] sm:$0xff] %vm285, %v905
    %v908 = vld [vmem:[#allocation2] sm:$0xff]
    %v909 = vld [vmem:[#allocation2 + $0x8] sm:$0xff]
    %v910 = vld [vmem:[#allocation2 + $0x10] sm:$0xff]
    %v911 = vld [vmem:[#allocation2 + $0x18] sm:$0xff]
    %v912 = vld [vmem:[#allocation2 + $0x20] sm:$0xff]
    %v913 = vld [vmem:[#allocation2 + $0x28] sm:$0xff]
    %v914 = vld [vmem:[#allocation2 + $0x30] sm:$0xff]
    %v915 = vld [vmem:[#allocation2 + $0x38] sm:$0xff]
    %v916 = vpack.c.bf16 %v909, %v908
    %v917 = vpack.c.bf16 %v911, %v910
    %v918 = vpack.c.bf16 %v913, %v912
    %v919 = vpack.c.bf16 %v915, %v914
    %v920 = vld [vmem:[#allocation6] sm:$0xf]
    %v921 = vld [vmem:[#allocation6 + $0x4] sm:$0xf]
    %v922 = vld [vmem:[#allocation6 + $0x8] sm:$0xf]
    %v923 = vld [vmem:[#allocation6 + $0xc] sm:$0xf]
    %v924 = vld [vmem:[#allocation8] sm:$0x1]
    %v926 = vlaneseq
    %v927 = vshrl.u32 %v926, 7
    %v928 = vsub.s32 0, %v927
    %v929 = vrot.slane %v924, %v928
    %v935 = vunpack.c.l.b16 %v920
    %v936 = vunpack.c.l.b16 %v921
    %v937 = vunpack.c.l.b16 %v922
    %v938 = vunpack.c.l.b16 %v923
    %v939 = vpack.c.b16 %v936, %v935
    %v940 = vpack.c.b16 %v938, %v937
    %v944 = vsel %vm285, %v916, 0
    %v947 = vsel %vm285, %v917, 0
    %v950 = vsel %vm285, %v918, 0
    %v953 = vsel %vm285, %v919, 0
    %955 = vmatprep.subr.bf16.mxu0 0
    %956 = vmatpush1.bf16.msra.mxu0 0
    %957 = vmatprep.subr.bf16.mxu0 0
    %958 = vmatpush1.bf16.msra.mxu0 0
    %959 = vmatprep.subr.bf16.mxu0 0
    %960 = vmatpush1.bf16.msra.mxu0 0
    %961 = vmatprep.subr.bf16.mxu0 0
    %962 = vmatpush1.bf16.msra.mxu0 0
    %963 = vmatprep.subr.bf16.mxu0 0
    %964 = vmatpush1.bf16.msra.mxu0 0
    %965 = vmatprep.subr.bf16.mxu0 0
    %966 = vmatpush1.bf16.msra.mxu0 0
    %967 = vmatprep.subr.bf16.mxu0 0
    %968 = vmatpush1.bf16.msra.mxu0 %v940
    %969 = vmatprep.subr.bf16.mxu0 0
    %970 = vmatpush1.bf16.msra.mxu0 %v939
    %971 = vmatprep.subr.bf16.mxu0 0
    %972 = vmatpush2.bf16.msra.mxu0 0
    %973 = vmatprep.subr.bf16.mxu0 0
    %974 = vmatpush2.bf16.msra.mxu0 0
    %975 = vmatprep.subr.bf16.mxu0 0
    %976 = vmatpush2.bf16.msra.mxu0 0
    %977 = vmatprep.subr.bf16.mxu0 0
    %978 = vmatpush2.bf16.msra.mxu0 0
    %979 = vmatprep.subr.bf16.mxu0 0
    %980 = vmatpush2.bf16.msra.mxu0 0
    %981 = vmatprep.subr.bf16.mxu0 0
    %982 = vmatpush2.bf16.msra.mxu0 0
    %983 = vmatprep.subr.bf16.mxu0 0
    %984 = vmatpush2.bf16.msra.mxu0 0
    %985 = vmatprep.subr.bf16.mxu0 0
    %986 = vmatpush2.bf16.msra.mxu0 0
    %987 = vmatprep.mubr.bf16.mxu0 0
    %988 = vmatmul.mubr.bf16.gmra.mxu0 %v944
    %v989 = vpop.f32.mrf.mxu0
    %v990 = vadd.f32 %v929, %v989
    %v991 = vpop.f32.mrf.mxu0
    %v992 = vpop.f32.mrf.mxu0
    %v993 = vadd.f32 %v929, %v992
    %v994 = vpop.f32.mrf.mxu0
    %995 = vmatprep.mubr.bf16.mxu0 0
    %996 = vmatmul.mubr.bf16.gmra.mxu0 %v947
    %v997 = vpop.f32.mrf.mxu0
    %v998 = vadd.f32 %v929, %v997
    %v999 = vpop.f32.mrf.mxu0
    %v1000 = vpop.f32.mrf.mxu0
    %v1001 = vadd.f32 %v929, %v1000
    %v1002 = vpop.f32.mrf.mxu0
    %1003 = vmatprep.mubr.bf16.mxu0 0
    %1004 = vmatmul.mubr.bf16.gmra.mxu0 %v950
    %v1005 = vpop.f32.mrf.mxu0
    %v1006 = vadd.f32 %v929, %v1005
    %v1007 = vpop.f32.mrf.mxu0
    %v1008 = vpop.f32.mrf.mxu0
    %v1009 = vadd.f32 %v929, %v1008
    %v1010 = vpop.f32.mrf.mxu0
    %1011 = vmatprep.mubr.bf16.mxu0 0
    %1012 = vmatmul.mubr.bf16.gmra.mxu0 %v953
    %v1013 = vpop.f32.mrf.mxu0
    %v1014 = vadd.f32 %v929, %v1013
    %v1015 = vpop.f32.mrf.mxu0
    %v1016 = vpop.f32.mrf.mxu0
    %v1017 = vadd.f32 %v929, %v1016
    %v1018 = vpop.f32.mrf.mxu0
    %1019 = vdwg.mxu0
    %1020 = vst [vmem:[#allocation11] sm:$0xff] %v990
    %1021 = vst [vmem:[#allocation11 + $0x8] sm:$0xff] %v993
    %1022 = vst [vmem:[#allocation11 + $0x10] sm:$0xff] %v998
    %1023 = vst [vmem:[#allocation11 + $0x18] sm:$0xff] %v1001
    %1024 = vst [vmem:[#allocation11 + $0x20] sm:$0xff] %v1006
    %1025 = vst [vmem:[#allocation11 + $0x28] sm:$0xff] %v1009
    %1026 = vst [vmem:[#allocation11 + $0x30] sm:$0xff] %v1014
    %1027 = vst [vmem:[#allocation11 + $0x38] sm:$0xff] %v1017
    // Predicated region
    $region46: #{tpu_custom_call.1} parent=1 // pred_check
      _
    $region47: #{tpu_custom_call.1} parent=1 // pred_check_branch
      %1029 = sbr.rel (0) target = $region49
    $region48: #{tpu_custom_call.1} parent=1 // pred_region
      %s1031 = ssub.s32 1024, 1024
      %1032 = vsyncadd [#allocation5], %s1031
      %s1033 = sshll.u32 [#allocation11], 4
      %s1034 = int_to_ptr.vmem [resolvable:$true] %s1033
      %1039 = dma.vmem_to_hbm [thread:$0]  %s1034, 1024, %s7, [#allocation5], 128, 128, 8
    $region49: #{tpu_custom_call.1} parent=1 // pred_fallthru
      _
    // Predicated region
    $region50: #{tpu_custom_call.1} parent=1 // pred_check
      _
    $region51: #{tpu_custom_call.1} parent=1 // pred_check_branch
      %1041 = sbr.rel (0) target = $region53
    $region52: #{tpu_custom_call.1} parent=1 // pred_region
      %s1043 = ssub.s32 128, 128
      %1044 = vsyncadd [#allocation13], %s1043
      %s1046 = sshll.u32 [#allocation12], 4
      %s1047 = int_to_ptr.vmem [resolvable:$true] %s1046
      %1049 = dma.vmem_to_hbm [thread:$0]  %s1047, 128, %s8, [#allocation13]
    $region53: #{tpu_custom_call.1} parent=1 // pred_fallthru
      _
    // Predicated region
    $region54: #{tpu_custom_call.1} parent=1 // pred_check
      _
    $region55: #{tpu_custom_call.1} parent=1 // pred_check_branch
      %1051 = sbr.rel (0) target = $region57
    $region56: #{tpu_custom_call.1} parent=1 // pred_region
      %s1053 = ssub.s32 128, 128
      %1054 = vsyncadd [#allocation13], %s1053
      %s1056 = sshll.u32 [#allocation14], 4
      %s1057 = int_to_ptr.vmem [resolvable:$true] %s1056
      %1059 = dma.vmem_to_hbm [thread:$0]  %s1057, 128, %s9, [#allocation13]
    $region57: #{tpu_custom_call.1} parent=1 // pred_fallthru
      _
    // Predicated region
    $region58: #{tpu_custom_call.1} parent=1 // pred_check
      _
    $region59: #{tpu_custom_call.1} parent=1 // pred_check_branch
      %1061 = sbr.rel (0) target = $region61
    $region60: #{tpu_custom_call.1} parent=1 // pred_region
      %1062 = dma.done [#allocation5], 1024
    $region61: #{tpu_custom_call.1} parent=1 // pred_fallthru
      _
    // Predicated region
    $region62: #{tpu_custom_call.1} parent=1 // pred_check
      _
    $region63: #{tpu_custom_call.1} parent=1 // pred_check_branch
      %1064 = sbr.rel (0) target = $region65
    $region64: #{tpu_custom_call.1} parent=1 // pred_region
      %1065 = dma.done [#allocation13], 128
    $region65: #{tpu_custom_call.1} parent=1 // pred_fallthru
      _
    // Predicated region
    $region66: #{tpu_custom_call.1} parent=1 // pred_check
      _
    $region67: #{tpu_custom_call.1} parent=1 // pred_check_branch
      %1067 = sbr.rel (0) target = $region69
    $region68: #{tpu_custom_call.1} parent=1 // pred_region
      %1068 = dma.done [#allocation13], 128
    $region69: #{tpu_custom_call.1} parent=1 // pred_fallthru
      _
    %1069 = vsyncpa [#allocation4], 1
    %1070 = vsyncpa [#allocation7], 1
    %1071 = vsyncpa [#allocation10], 1
    %1072 = vsyncpa [#allocation5], 1
    %1073 = vsyncpa [#allocation13], 1

</llo_original>
